<compile_context>
chip_gen: v6e
topology: v6e:2x2x1
jax: 0.10.0
libtpu: 0.0.40
codegen_flags: <defaults>
</compile_context>

<pallas_src>
import functools

import jax
import jax.numpy as jnp
import numpy as np
from jax import lax
from jax.experimental import pallas as pl
from jax.experimental.pallas import tpu as pltpu

_LANES = 128
_MAX_TILE_ROWS = 1024   # 512 KiB f32 block; ~85% of HBM roofline territory
_N_CORES = 2            # leading "parallel" axis for v7x's 2 TCs (free on 1-TC chips)


def _mixed_loss_kernel(x_ref, t_ref, acc_ref, *, gamma, tile_rows,
                       steps_per_core, n_valid, needs_mask):
    c = pl.program_id(0)
    k = pl.program_id(1)

    @pl.when(k == 0)
    def _():
        acc_ref[...] = jnp.zeros_like(acc_ref)

    x = x_ref[...].astype(jnp.float32)
    t = t_ref[...].astype(jnp.float32)

    # --- stable BCE-with-logits:  max(x,0) - x*t + log1p(exp(-|x|)) ---
    bce = jnp.maximum(x, 0.0) - x * t + jnp.log1p(jnp.exp(-jnp.abs(x)))

    # --- logsigmoid(-x*(2t-1)) = min(z,0) - log1p(exp(-|z|)) ---
    z = -x * (t * 2.0 - 1.0)
    invprobs = jnp.minimum(z, 0.0) - jnp.log1p(jnp.exp(-jnp.abs(z)))

    focal_elem = jnp.exp(invprobs * gamma) * bce

    if needs_mask:
        # Only the focal term needs masking: zero-padded x/t already make the
        # x, t and x*t sums exact, but focal(0,0) = 2^-gamma * log(2) != 0.
        g = c * steps_per_core + k
        row0 = g * tile_rows
        row_ids = lax.broadcasted_iota(jnp.int32, (tile_rows, _LANES), 0)
        col_ids = lax.broadcasted_iota(jnp.int32, (tile_rows, _LANES), 1)
        idx = (row0 + row_ids) * _LANES + col_ids
        focal_elem = jnp.where(idx < n_valid, focal_elem, 0.0)

    # --- fold the (tile_rows, 128) tile into an (8, 128) partial (VPU adds) ---
    def fold(v):
        return jnp.sum(v.reshape(tile_rows // 8, 8, _LANES), axis=0)

    acc_ref[0, 0] += fold(focal_elem)
    acc_ref[0, 1] += fold(x * t)
    acc_ref[0, 2] += fold(x)
    acc_ref[0, 3] += fold(t)


def mixed_loss(x, target, *, alpha, gamma):
    """JAX/Pallas equivalent of MixedLoss(alpha, gamma).forward(x, target)."""
    if x.shape != target.shape:
        raise ValueError("Target size must be the same as input size")

    n = int(np.prod(x.shape))
    rows = pl.cdiv(n, _LANES)
    tile_rows = min(_MAX_TILE_ROWS, pl.cdiv(rows, 8) * 8)
    tiles = pl.cdiv(rows, tile_rows)
    steps_per_core = pl.cdiv(tiles, _N_CORES)
    total_rows = _N_CORES * steps_per_core * tile_rows
    total_elems = total_rows * _LANES
    needs_mask = total_elems != n

    def prep(a):
        flat = a.reshape(-1)          # keep original dtype; cast in-kernel
        if total_elems > n:
            flat = jnp.pad(flat, (0, total_elems - n))
        return flat.reshape(total_rows, _LANES)

    x2d = prep(x)
    t2d = prep(target)

    kernel = functools.partial(
        _mixed_loss_kernel, gamma=float(gamma), tile_rows=tile_rows,
        steps_per_core=steps_per_core, n_valid=n, needs_mask=needs_mask)

    in_spec = pl.BlockSpec((tile_rows, _LANES),
                           lambda c, k: (c * steps_per_core + k, 0))
    # Output block depends only on the parallel core axis -> resident vector
    # accumulator across the "arbitrary" reduction axis.
    out_spec = pl.BlockSpec((1, 4, 8, _LANES), lambda c, k: (c, 0, 0, 0))

    partials = pl.pallas_call(
        kernel,
        out_shape=jax.ShapeDtypeStruct((_N_CORES, 4, 8, _LANES), jnp.float32),
        grid_spec=pltpu.PrefetchScalarGridSpec(
            num_scalar_prefetch=0,
            grid=(_N_CORES, steps_per_core),
            in_specs=[in_spec, in_spec],
            out_specs=out_spec,
        ),
        compiler_params=pltpu.CompilerParams(
            dimension_semantics=("parallel", "arbitrary")),
    )(x2d, t2d)

    sums = jnp.sum(partials, axis=(0, 2, 3))            # (4,)
    s_focal, s_inter, s_x, s_t = sums[0], sums[1], sums[2], sums[3]

    focal = s_focal / jnp.float32(n)                     # FocalLoss .mean()
    smooth = jnp.float32(1.0)
    dice = 1.0 - (2.0 * s_inter + smooth) / (s_x + s_t + smooth)   # dice_loss
    loss = jnp.float32(alpha) * focal - jnp.log(dice)
    return loss  # .mean() of a scalar is the scalar itself


def _reference(x, target, *, alpha, gamma):
    """Pure-JAX reference mirroring the PyTorch code (for sanity check)."""
    x = x.astype(jnp.float32)
    t = target.astype(jnp.float32)
    max_val = jnp.maximum(-x, 0.0)
    loss = x - x * t + max_val + jnp.log(jnp.exp(-max_val) + jnp.exp(-x - max_val))
    invprobs = jax.nn.log_sigmoid(-x * (t * 2.0 - 1.0))
    focal = jnp.mean(jnp.exp(invprobs * gamma) * loss)
    i_flat = x.reshape(-1)
    t_flat = t.reshape(-1)
    inter = jnp.sum(i_flat * t_flat)
    dice = 1.0 - (2.0 * inter + 1.0) / (jnp.sum(i_flat) + jnp.sum(t_flat) + 1.0)
    return alpha * focal - jnp.log(dice)


if __name__ == "__main__":
    key = jax.random.PRNGKey(0)
    k1, k2 = jax.random.split(key)

    # Small NCHW-like shapes consistent with a segmentation loss.
    x = jax.random.normal(k1, (2, 4, 16, 16), dtype=jnp.float32)          # logits
    target = (jax.random.uniform(k2, (2, 4, 16, 16)) > 0.5).astype(jnp.float32)

    alpha, gamma = 10.0, 2.0

    out = mixed_loss(x, target, alpha=alpha, gamma=gamma)
    out = jax.block_until_ready(out)

    ref = _reference(x, target, alpha=alpha, gamma=gamma)
    np.testing.assert_allclose(np.asarray(out), np.asarray(ref), rtol=1e-5, atol=1e-5)

    print("KERNEL_OK")
</pallas_src>

<mosaic_0001>
module attributes {stable_mosaic.version = 11 : i64} {
  func.func @_mixed_loss_kernel(%arg0: i32, %arg1: i32, %arg2: memref<16x128xf32, #tpu.memory_space<vmem>>, %arg3: memref<16x128xf32, #tpu.memory_space<vmem>>, %arg4: memref<1x4x8x128xf32, #tpu.memory_space<vmem>>) attributes {dimension_semantics = [#tpu.dimension_semantics<parallel>, #tpu.dimension_semantics<arbitrary>], iteration_bounds = array<i64: 2, 1>, scalar_prefetch = 0 : i64, scratch_operands = 0 : i64, tpu.core_type = #tpu.core_type<tc>, window_params = [{transform_indices = @transform_0, window_bounds = array<i64: 16, 128>}, {transform_indices = @transform_1, window_bounds = array<i64: 16, 128>}, {transform_indices = @transform_2, window_bounds = array<i64: 1, 4, 8, 128>}]} {
    %c0_i32 = arith.constant 0 : i32
    %0 = arith.cmpi eq, %arg1, %c0_i32 : i32
    %1 = arith.extui %0 : i1 to i32
    %c0_i32_0 = arith.constant 0 : i32
    %2 = arith.cmpi ne, %1, %c0_i32_0 : i32
    scf.if %2 {
      %cst_45 = arith.constant 0.000000e+00 : f32
      %81 = vector.broadcast %cst_45 : f32 to vector<1x4x8x128xf32>
      %c0_46 = arith.constant 0 : index
      %c0_47 = arith.constant 0 : index
      %c0_48 = arith.constant 0 : index
      %c0_49 = arith.constant 0 : index
      %82 = vector.load %arg4[%c0_46, %c0_47, %c0_48, %c0_49] : memref<1x4x8x128xf32, #tpu.memory_space<vmem>>, vector<1x4x8x128xf32>
      tpu.vector_store %arg4[%c0_46, %c0_47, %c0_48, %c0_49], %81 {strides = array<i32>} : memref<1x4x8x128xf32, #tpu.memory_space<vmem>>, vector<1x4x8x128xf32>,
    } else {
    }
    %c0 = arith.constant 0 : index
    %c0_1 = arith.constant 0 : index
    %3 = vector.load %arg2[%c0, %c0_1] : memref<16x128xf32, #tpu.memory_space<vmem>>, vector<16x128xf32>
    %c0_2 = arith.constant 0 : index
    %c0_3 = arith.constant 0 : index
    %4 = vector.load %arg3[%c0_2, %c0_3] : memref<16x128xf32, #tpu.memory_space<vmem>>, vector<16x128xf32>
    %cst = arith.constant 0.000000e+00 : f32
    %5 = vector.broadcast %cst : f32 to vector<16x128xf32>
    %6 = arith.maximumf %3, %5 : vector<16x128xf32>
    %7 = arith.mulf %3, %4 : vector<16x128xf32>
    %8 = arith.subf %6, %7 : vector<16x128xf32>
    %9 = math.absf %3 : vector<16x128xf32>
    %cst_4 = arith.constant 0.000000e+00 : f32
    %10 = vector.broadcast %cst_4 : f32 to vector<16x128xf32>
    %11 = arith.subf %10, %9 : vector<16x128xf32>
    %12 = math.exp %11 : vector<16x128xf32>
    %13 = math.log1p %12 : vector<16x128xf32>
    %14 = arith.addf %8, %13 : vector<16x128xf32>
    %cst_5 = arith.constant 0.000000e+00 : f32
    %15 = vector.broadcast %cst_5 : f32 to vector<16x128xf32>
    %16 = arith.subf %15, %3 : vector<16x128xf32>
    %cst_6 = arith.constant 2.000000e+00 : f32
    %17 = vector.broadcast %cst_6 : f32 to vector<16x128xf32>
    %18 = arith.mulf %4, %17 : vector<16x128xf32>
    %cst_7 = arith.constant 1.000000e+00 : f32
    %19 = vector.broadcast %cst_7 : f32 to vector<16x128xf32>
    %20 = arith.subf %18, %19 : vector<16x128xf32>
    %21 = arith.mulf %16, %20 : vector<16x128xf32>
    %cst_8 = arith.constant 0.000000e+00 : f32
    %22 = vector.broadcast %cst_8 : f32 to vector<16x128xf32>
    %23 = arith.minimumf %21, %22 : vector<16x128xf32>
    %24 = math.absf %21 : vector<16x128xf32>
    %cst_9 = arith.constant 0.000000e+00 : f32
    %25 = vector.broadcast %cst_9 : f32 to vector<16x128xf32>
    %26 = arith.subf %25, %24 : vector<16x128xf32>
    %27 = math.exp %26 : vector<16x128xf32>
    %28 = math.log1p %27 : vector<16x128xf32>
    %29 = arith.subf %23, %28 : vector<16x128xf32>
    %cst_10 = arith.constant 2.000000e+00 : f32
    %30 = vector.broadcast %cst_10 : f32 to vector<16x128xf32>
    %31 = arith.mulf %29, %30 : vector<16x128xf32>
    %32 = math.exp %31 : vector<16x128xf32>
    %33 = arith.mulf %32, %14 : vector<16x128xf32>
    %c1_i32 = arith.constant 1 : i32
    %34 = arith.muli %arg0, %c1_i32 : i32
    %35 = arith.addi %34, %arg1 : i32
    %c16_i32 = arith.constant 16 : i32
    %36 = arith.muli %35, %c16_i32 : i32
    %37 = tpu.iota {dimensions = array<i32: 0>} : vector<16x128xi32>
    %38 = tpu.iota {dimensions = array<i32: 1>} : vector<16x128xi32>
    %39 = vector.broadcast %36 : i32 to vector<16x128xi32>
    %40 = arith.addi %39, %37 : vector<16x128xi32>
    %c128_i32 = arith.constant 128 : i32
    %41 = vector.broadcast %c128_i32 : i32 to vector<16x128xi32>
    %42 = arith.muli %40, %41 : vector<16x128xi32>
    %43 = arith.addi %42, %38 : vector<16x128xi32>
    %c2048_i32 = arith.constant 2048 : i32
    %44 = vector.broadcast %c2048_i32 : i32 to vector<16x128xi32>
    %45 = arith.cmpi slt, %43, %44 : vector<16x128xi32>
    %cst_11 = arith.constant 0.000000e+00 : f32
    %46 = vector.broadcast %cst_11 : f32 to vector<16x128xf32>
    %47 = arith.select %45, %33, %46 : vector<16x128xi1>, vector<16x128xf32>
    %c0_12 = arith.constant 0 : index
    %c0_13 = arith.constant 0 : index
    %c0_14 = arith.constant 0 : index
    %c0_15 = arith.constant 0 : index
    %48 = vector.load %arg4[%c0_12, %c0_13, %c0_14, %c0_15] : memref<1x4x8x128xf32, #tpu.memory_space<vmem>>, vector<1x1x8x128xf32>
    %49 = vector.shape_cast %48 : vector<1x1x8x128xf32> to vector<8x128xf32>
    %50 = vector.shape_cast %47 : vector<16x128xf32> to vector<2x8x128xf32>
    %cst_16 = arith.constant dense<0.000000e+00> : vector<8x128xf32>
    %51 = vector.multi_reduction <add>, %50, %cst_16 [0] : vector<2x8x128xf32> to vector<8x128xf32>
    %52 = arith.addf %49, %51 : vector<8x128xf32>
    %c0_17 = arith.constant 0 : index
    %c0_18 = arith.constant 0 : index
    %c0_19 = arith.constant 0 : index
    %c0_20 = arith.constant 0 : index
    %53 = vector.load %arg4[%c0_17, %c0_18, %c0_19, %c0_20] : memref<1x4x8x128xf32, #tpu.memory_space<vmem>>, vector<1x1x8x128xf32>
    %54 = vector.shape_cast %53 : vector<1x1x8x128xf32> to vector<8x128xf32>
    %55 = vector.shape_cast %52 : vector<8x128xf32> to vector<1x1x8x128xf32>
    tpu.vector_store %arg4[%c0_17, %c0_18, %c0_19, %c0_20], %55 {strides = array<i32>} : memref<1x4x8x128xf32, #tpu.memory_space<vmem>>, vector<1x1x8x128xf32>,
    %c0_21 = arith.constant 0 : index
    %c1 = arith.constant 1 : index
    %c0_22 = arith.constant 0 : index
    %c0_23 = arith.constant 0 : index
    %56 = vector.load %arg4[%c0_21, %c1, %c0_22, %c0_23] : memref<1x4x8x128xf32, #tpu.memory_space<vmem>>, vector<1x1x8x128xf32>
    %57 = vector.shape_cast %56 : vector<1x1x8x128xf32> to vector<8x128xf32>
    %58 = arith.mulf %3, %4 : vector<16x128xf32>
    %59 = vector.shape_cast %58 : vector<16x128xf32> to vector<2x8x128xf32>
    %cst_24 = arith.constant dense<0.000000e+00> : vector<8x128xf32>
    %60 = vector.multi_reduction <add>, %59, %cst_24 [0] : vector<2x8x128xf32> to vector<8x128xf32>
    %61 = arith.addf %57, %60 : vector<8x128xf32>
    %c0_25 = arith.constant 0 : index
    %c1_26 = arith.constant 1 : index
    %c0_27 = arith.constant 0 : index
    %c0_28 = arith.constant 0 : index
    %62 = vector.load %arg4[%c0_25, %c1_26, %c0_27, %c0_28] : memref<1x4x8x128xf32, #tpu.memory_space<vmem>>, vector<1x1x8x128xf32>
    %63 = vector.shape_cast %62 : vector<1x1x8x128xf32> to vector<8x128xf32>
    %64 = vector.shape_cast %61 : vector<8x128xf32> to vector<1x1x8x128xf32>
    tpu.vector_store %arg4[%c0_25, %c1_26, %c0_27, %c0_28], %64 {strides = array<i32>} : memref<1x4x8x128xf32, #tpu.memory_space<vmem>>, vector<1x1x8x128xf32>,
    %c0_29 = arith.constant 0 : index
    %c2 = arith.constant 2 : index
    %c0_30 = arith.constant 0 : index
    %c0_31 = arith.constant 0 : index
    %65 = vector.load %arg4[%c0_29, %c2, %c0_30, %c0_31] : memref<1x4x8x128xf32, #tpu.memory_space<vmem>>, vector<1x1x8x128xf32>
    %66 = vector.shape_cast %65 : vector<1x1x8x128xf32> to vector<8x128xf32>
    %67 = vector.shape_cast %3 : vector<16x128xf32> to vector<2x8x128xf32>
    %cst_32 = arith.constant dense<0.000000e+00> : vector<8x128xf32>
    %68 = vector.multi_reduction <add>, %67, %cst_32 [0] : vector<2x8x128xf32> to vector<8x128xf32>
    %69 = arith.addf %66, %68 : vector<8x128xf32>
    %c0_33 = arith.constant 0 : index
    %c2_34 = arith.constant 2 : index
    %c0_35 = arith.constant 0 : index
    %c0_36 = arith.constant 0 : index
    %70 = vector.load %arg4[%c0_33, %c2_34, %c0_35, %c0_36] : memref<1x4x8x128xf32, #tpu.memory_space<vmem>>, vector<1x1x8x128xf32>
    %71 = vector.shape_cast %70 : vector<1x1x8x128xf32> to vector<8x128xf32>
    %72 = vector.shape_cast %69 : vector<8x128xf32> to vector<1x1x8x128xf32>
    tpu.vector_store %arg4[%c0_33, %c2_34, %c0_35, %c0_36], %72 {strides = array<i32>} : memref<1x4x8x128xf32, #tpu.memory_space<vmem>>, vector<1x1x8x128xf32>,
    %c0_37 = arith.constant 0 : index
    %c3 = arith.constant 3 : index
    %c0_38 = arith.constant 0 : index
    %c0_39 = arith.constant 0 : index
    %73 = vector.load %arg4[%c0_37, %c3, %c0_38, %c0_39] : memref<1x4x8x128xf32, #tpu.memory_space<vmem>>, vector<1x1x8x128xf32>
    %74 = vector.shape_cast %73 : vector<1x1x8x128xf32> to vector<8x128xf32>
    %75 = vector.shape_cast %4 : vector<16x128xf32> to vector<2x8x128xf32>
    %cst_40 = arith.constant dense<0.000000e+00> : vector<8x128xf32>
    %76 = vector.multi_reduction <add>, %75, %cst_40 [0] : vector<2x8x128xf32> to vector<8x128xf32>
    %77 = arith.addf %74, %76 : vector<8x128xf32>
    %c0_41 = arith.constant 0 : index
    %c3_42 = arith.constant 3 : index
    %c0_43 = arith.constant 0 : index
    %c0_44 = arith.constant 0 : index
    %78 = vector.load %arg4[%c0_41, %c3_42, %c0_43, %c0_44] : memref<1x4x8x128xf32, #tpu.memory_space<vmem>>, vector<1x1x8x128xf32>
    %79 = vector.shape_cast %78 : vector<1x1x8x128xf32> to vector<8x128xf32>
    %80 = vector.shape_cast %77 : vector<8x128xf32> to vector<1x1x8x128xf32>
    tpu.vector_store %arg4[%c0_41, %c3_42, %c0_43, %c0_44], %80 {strides = array<i32>} : memref<1x4x8x128xf32, #tpu.memory_space<vmem>>, vector<1x1x8x128xf32>,
    return
  }
  func.func @transform_0(%arg0: i32, %arg1: i32) -> (i32, i32) {
    %c1_i32 = arith.constant 1 : i32
    %0 = arith.muli %arg0, %c1_i32 : i32
    %1 = arith.addi %0, %arg1 : i32
    %c0_i32 = arith.constant 0 : i32
    %c0_i32_0 = arith.constant 0 : i32
    return %1, %c0_i32 : i32, i32
  }
  func.func @transform_1(%arg0: i32, %arg1: i32) -> (i32, i32) {
    %c1_i32 = arith.constant 1 : i32
    %0 = arith.muli %arg0, %c1_i32 : i32
    %1 = arith.addi %0, %arg1 : i32
    %c0_i32 = arith.constant 0 : i32
    %c0_i32_0 = arith.constant 0 : i32
    return %1, %c0_i32 : i32, i32
  }
  func.func @transform_2(%arg0: i32, %arg1: i32) -> (i32, i32, i32, i32) {
    %c0_i32 = arith.constant 0 : i32
    %c0_i32_0 = arith.constant 0 : i32
    %c0_i32_1 = arith.constant 0 : i32
    %c0_i32_2 = arith.constant 0 : i32
    return %arg0, %c0_i32, %c0_i32_0, %c0_i32_1 : i32, i32, i32, i32
  }
}

</mosaic_0001>

<llo_original>
// kernel: tpu_custom_call.1
$region0: #{tpu_custom_call.1}
  #allocation0 [shape = 'u32[]', space=smem, size = 0x4, offset = 0x4, fixed_abs, tag = 'smem constant byte address 0x4 - core index']
  #allocation1 [shape = 'u32[144,128]{1,0:T(1,128)}', space=vmem, size = 0x12000, scoped, tag = 'internal scratch']
  %s0 = inlined_call_operand.hbm [shape: f32[32,128], index: 0, kind: input, shape index: {}]
  %s1 = inlined_call_operand.hbm [shape: f32[32,128], index: 1, kind: input, shape index: {}]
  %s2 = inlined_call_operand.hbm [shape: f32[2,4,8,128], index: 2, kind: output, shape index: {}]
  %s3 = sld [smem:[#allocation0]]
  $region53: #{tpu_custom_call.1} parent=0
    _
  %s5 = ssub.s32 1, %s3
  %s6 = scalar_select 0, %s5, %s3
  $region1: #{tpu_custom_call.1} parent=0
    #allocation2 [shape = 'u8[16384]{0}', space=vmem, size = 0x4000, scoped, tag = 'input window, operand 0']
    #allocation3 [shape = 's32[2]{0}', space=sflag, size = 0x8, scoped, tag = 'scoped memory for tpu_custom_call.1']
    #allocation4 [shape = 's32[2]{0}', space=sflag, size = 0x8, scoped, tag = 'scoped memory for tpu_custom_call.1']
    #allocation5 [shape = 'u8[16384]{0}', space=vmem, size = 0x4000, scoped, tag = 'input window, operand 1']
    #allocation6 [shape = 's32[2]{0}', space=sflag, size = 0x8, scoped, tag = 'scoped memory for tpu_custom_call.1']
    #allocation7 [shape = 'u8[32768]{0}', space=vmem, size = 0x8000, scoped, tag = 'output window, operand 0']
    %7 = vsyncpa [#allocation3], 0
    %s8 = scalar_lea.sflag [#allocation3], 1
    %9 = vsyncpa %s8, 0
    %10 = vsyncpa [#allocation6], 0
    %s11 = scalar_lea.sflag [#allocation6], 1
    %12 = vsyncpa %s11, 0
    %13 = vsyncpa [#allocation4], 0
    %s14 = scalar_lea.sflag [#allocation4], 1
    %15 = vsyncpa %s14, 0
    loop: start=0, step=1, limit=4
    $region2: #{tpu_custom_call.1} parent=1 // loop_pre_header
      _
    $region3: #{tpu_custom_call.1} parent=1 // loop_header
      %s17 = sphi 0, %s21
      %p18 = scmp.ge.s32.totalorder %s17, 4
      %s24 = sphi 0, %s36
      %s25 = sphi 0, %s32
      %s26 = sphi 0, %s24
      %s27 = sphi 0, %s25
      %s28 = sphi 0, %s26
      %s29 = sphi 0, %s27
      %s41 = sphi 0, %s43
      %s44 = sphi 0, %s41
      %s45 = sphi 0, %s44
      %s61 = sphi 0, %s45
      %s69 = sphi 0, %s71
      %s72 = sphi 0, %s69
      %s73 = sphi 0, %s72
      %s89 = sphi 0, %s73
      %s95 = sphi 0, %s97
      %s98 = sphi 0, %s95
      %s99 = sphi 0, %s98
      %s115 = sphi 0, %s99
    $region4: #{tpu_custom_call.1} parent=1 // loop_header_branch
      %20 = sbr.rel (%p18) target = $region8
    $region5: #{tpu_custom_call.1} parent=1 // loop_body
      %s22 = ssub.s32 %s17, 1
      %s23 = ssub.s32 %s17, 2
      %s30 = sadd.s32 1, %s25
      %p31 = scmp.ge.s32.totalorder %s30, 1
      %s32 = scalar_select %p31, 0, %s30
      %s33 = sadd.s32 1, %s24
      %s34 = scalar_select %p31, %s33, %s24
      %p35 = scmp.ge.s32.totalorder %s34, 2
      %s36 = scalar_select %p35, 0, %s34
      %s37 = sadd.s32 %s24, %s25
      %s38 = sadd.s32 %s36, %s32
      %s39 = ssub.s32 %s37, %s38
      %p40 = scmp.eq.s32.totalorder %s39, 0
      %s42 = sadd.s32 %s41, 1
      %s43 = scalar_select %p40, %s41, %s42
      %p46 = pneg %p40
      %p47 = scmp.eq.s32.totalorder %s17, 1
      %p48 = por %p46, %p47
      %p49 = scmp.ne.s32.totalorder %s41, %s44
      %p50 = scmp.eq.s32.totalorder %s17, 0
      %p51 = por %p49, %p50
      %p52 = scmp.ne.s32.totalorder %s41, %s44
      %p53 = scmp.eq.s32.totalorder %s22, 1
      %p54 = por %p52, %p53
      %p55 = scmp.ne.s32.totalorder %s44, %s45
      %p56 = scmp.eq.s32.totalorder %s22, 0
      %p57 = por %p55, %p56
      %p58 = scmp.ne.s32.totalorder %s44, %s45
      %p59 = scmp.eq.s32.totalorder %s23, 1
      %p60 = por %p58, %p59
      %p62 = scmp.ne.s32.totalorder %s45, %s61
      %p63 = scmp.eq.s32.totalorder %s23, 0
      %p64 = por %p62, %p63
      %s65 = sadd.s32 %s24, %s25
      %s66 = sadd.s32 %s36, %s32
      %s67 = ssub.s32 %s65, %s66
      %p68 = scmp.eq.s32.totalorder %s67, 0
      %s70 = sadd.s32 %s69, 1
      %s71 = scalar_select %p68, %s69, %s70
      %p74 = pneg %p68
      %p75 = scmp.eq.s32.totalorder %s17, 1
      %p76 = por %p74, %p75
      %p77 = scmp.ne.s32.totalorder %s69, %s72
      %p78 = scmp.eq.s32.totalorder %s17, 0
      %p79 = por %p77, %p78
      %p80 = scmp.ne.s32.totalorder %s69, %s72
      %p81 = scmp.eq.s32.totalorder %s22, 1
      %p82 = por %p80, %p81
      %p83 = scmp.ne.s32.totalorder %s72, %s73
      %p84 = scmp.eq.s32.totalorder %s22, 0
      %p85 = por %p83, %p84
      %p86 = scmp.ne.s32.totalorder %s72, %s73
      %p87 = scmp.eq.s32.totalorder %s23, 1
      %p88 = por %p86, %p87
      %p90 = scmp.ne.s32.totalorder %s73, %s89
      %p91 = scmp.eq.s32.totalorder %s23, 0
      %p92 = por %p90, %p91
      %s93 = ssub.s32 %s24, %s36
      %p94 = scmp.eq.s32.totalorder %s93, 0
      %s96 = sadd.s32 %s95, 1
      %s97 = scalar_select %p94, %s95, %s96
      %p100 = pneg %p94
      %p101 = scmp.eq.s32.totalorder %s17, 1
      %p102 = por %p100, %p101
      %p103 = scmp.ne.s32.totalorder %s95, %s98
      %p104 = scmp.eq.s32.totalorder %s17, 0
      %p105 = por %p103, %p104
      %p106 = scmp.ne.s32.totalorder %s95, %s98
      %p107 = scmp.eq.s32.totalorder %s22, 1
      %p108 = por %p106, %p107
      %p109 = scmp.ne.s32.totalorder %s98, %s99
      %p110 = scmp.eq.s32.totalorder %s22, 0
      %p111 = por %p109, %p110
      %p112 = scmp.ne.s32.totalorder %s98, %s99
      %p113 = scmp.eq.s32.totalorder %s23, 1
      %p114 = por %p112, %p113
      %p116 = scmp.ne.s32.totalorder %s99, %s115
      %p117 = scmp.eq.s32.totalorder %s23, 0
      %p118 = por %p116, %p117
      %p119 = scmp.le.s32.totalorder 1, %s17
      %p120 = scmp.lt.s32.totalorder %s17, 3
      %p121 = pnand %p119, %p120
      %p122 = pneg %p121
      // Predicated region
      $region9: #{tpu_custom_call.1} parent=5 // pred_check
        _
      $region10: #{tpu_custom_call.1} parent=5 // pred_check_branch
        %124 = sbr.rel (%p121) target = $region12
      $region11: #{tpu_custom_call.1} parent=5 // pred_region
        %s125 = ssub.s32 %s17, 1
      $region12: #{tpu_custom_call.1} parent=5 // pred_fallthru
        _
      %p126 = scmp.lt.s32.totalorder %s17, 2
      // Predicated region
      $region13: #{tpu_custom_call.1} parent=5 // pred_check
        %p127 = pneg %p126
      $region14: #{tpu_custom_call.1} parent=5 // pred_check_branch
        %129 = sbr.rel (%p127) target = $region16
      $region15: #{tpu_custom_call.1} parent=5 // pred_region
        // Predicated region
        $region17: #{tpu_custom_call.1} parent=15 // pred_check
          %p130 = pneg %p51
        $region18: #{tpu_custom_call.1} parent=15 // pred_check_branch
          %132 = sbr.rel (%p130) target = $region20
        $region19: #{tpu_custom_call.1} parent=15 // pred_region
          %s133 = sand.u32 %s41, 1
          %s134 = scalar_lea.sflag [#allocation3], %s133
          %s135 = sand.u32 %s41, 1
          %s136 = smul.addr %s135, 16
          %s137 = scalar_lea.vmem [#allocation2], %s136
          %s138 = sadd.s32 %s24, %s25
          %s139 = smul.u32 2, %s138
          %s141 = ssub.s32 256, 256
          %142 = vsyncadd %s134, %s141
          %s143 = smul.addr %s139, 128
          %s144 = scalar_lea.hbm %s0, %s143
          %s145 = sshll.u32 %s137, 4
          %s146 = int_to_ptr.vmem [resolvable:$true] %s145
          %151 = dma.hbm_to_vmem [thread:$0]  %s144, 256, %s146, %s134, 128, 128, 8
        $region20: #{tpu_custom_call.1} parent=15 // pred_fallthru
          _
        // Predicated region
        $region21: #{tpu_custom_call.1} parent=15 // pred_check
          %p152 = pneg %p79
        $region22: #{tpu_custom_call.1} parent=15 // pred_check_branch
          %154 = sbr.rel (%p152) target = $region24
        $region23: #{tpu_custom_call.1} parent=15 // pred_region
          %s155 = sand.u32 %s69, 1
          %s156 = scalar_lea.sflag [#allocation6], %s155
          %s157 = sand.u32 %s69, 1
          %s158 = smul.addr %s157, 16
          %s159 = scalar_lea.vmem [#allocation5], %s158
          %s160 = sadd.s32 %s24, %s25
          %s161 = smul.u32 2, %s160
          %s163 = ssub.s32 256, 256
          %164 = vsyncadd %s156, %s163
          %s165 = smul.addr %s161, 128
          %s166 = scalar_lea.hbm %s1, %s165
          %s167 = sshll.u32 %s159, 4
          %s168 = int_to_ptr.vmem [resolvable:$true] %s167
          %173 = dma.hbm_to_vmem [thread:$0]  %s166, 256, %s168, %s156, 128, 128, 8
        $region24: #{tpu_custom_call.1} parent=15 // pred_fallthru
          _
      $region16: #{tpu_custom_call.1} parent=5 // pred_fallthru
        _
      %p174 = scmp.le.s32.totalorder 1, %s17
      %p175 = scmp.lt.s32.totalorder %s17, 3
      %p176 = pnand %p174, %p175
      %p177 = pneg %p176
      // Predicated region
      $region25: #{tpu_custom_call.1} parent=5 // pred_check
        _
      $region26: #{tpu_custom_call.1} parent=5 // pred_check_branch
        %179 = sbr.rel (%p176) target = $region28
      $region27: #{tpu_custom_call.1} parent=5 // pred_region
        %s180 = ssub.s32 %s17, 1
        %s181 = sand.u32 %s44, 1
        %s182 = scalar_lea.sflag [#allocation3], %s181
        %s183 = sand.u32 %s44, 1
        %s184 = smul.addr %s183, 16
        %s185 = scalar_lea.vmem [#allocation2], %s184
        // Predicated region
        $region29: #{tpu_custom_call.1} parent=27 // pred_check
          %p186 = pneg %p57
        $region30: #{tpu_custom_call.1} parent=27 // pred_check_branch
          %188 = sbr.rel (%p186) target = $region32
        $region31: #{tpu_custom_call.1} parent=27 // pred_region
          %189 = dma.done %s182, 256
        $region32: #{tpu_custom_call.1} parent=27 // pred_fallthru
          _
        %s190 = sand.u32 %s72, 1
        %s191 = scalar_lea.sflag [#allocation6], %s190
        %s192 = sand.u32 %s72, 1
        %s193 = smul.addr %s192, 16
        %s194 = scalar_lea.vmem [#allocation5], %s193
        // Predicated region
        $region33: #{tpu_custom_call.1} parent=27 // pred_check
          %p195 = pneg %p85
        $region34: #{tpu_custom_call.1} parent=27 // pred_check_branch
          %197 = sbr.rel (%p195) target = $region36
        $region35: #{tpu_custom_call.1} parent=27 // pred_region
          %198 = dma.done %s191, 256
        $region36: #{tpu_custom_call.1} parent=27 // pred_fallthru
          _
        %s199 = sand.u32 %s44, 1
        %s200 = scalar_lea.sflag [#allocation3], %s199
        %s201 = sand.u32 %s44, 1
        %s202 = smul.addr %s201, 16
        %s203 = scalar_lea.vmem [#allocation2], %s202
        %p204 = pneg %p57
        %p205 = pneg %p54
        %s206 = sand.u32 %s72, 1
        %s207 = scalar_lea.sflag [#allocation6], %s206
        %s208 = sand.u32 %s72, 1
        %s209 = smul.addr %s208, 16
        %s210 = scalar_lea.vmem [#allocation5], %s209
        %p211 = pneg %p85
        %p212 = pneg %p82
        %p213 = pneg %p111
        %p214 = pneg %p108
        %s215 = sand.u32 %s98, 1
        %s216 = scalar_lea.sflag [#allocation4], %s215
        %s217 = sand.u32 %s98, 1
        %s218 = smul.addr %s217, 32
        %s219 = scalar_lea.vmem [#allocation7], %s218
        %s220 = sadd.s32 %s26, %s27
        %s221 = smul.u32 2, %s220
        %s222 = sadd.s32 %s26, %s27
        %s223 = smul.u32 2, %s222
        %p224 = scmp.eq.s32.totalorder %s27, 0
        // Predicated region
        $region37: #{tpu_custom_call.1} parent=27 // pred_check
          %p225 = pneg %p224
        $region38: #{tpu_custom_call.1} parent=27 // pred_check_branch
          %227 = sbr.rel (%p225) target = $region40
        $region39: #{tpu_custom_call.1} parent=27 // pred_region
          %228 = vst [vmem:[%s219] sm:$0xff] 0.0
          %229 = vst [vmem:[%s219 + $0x8] sm:$0xff] 0.0
          %230 = vst [vmem:[%s219 + $0x10] sm:$0xff] 0.0
          %231 = vst [vmem:[%s219 + $0x18] sm:$0xff] 0.0
        $region40: #{tpu_custom_call.1} parent=27 // pred_fallthru
          _
        %v232 = vld [vmem:[%s185] sm:$0xff]
        %v233 = vld [vmem:[%s185 + $0x8] sm:$0xff]
        %v234 = vld [vmem:[%s194] sm:$0xff]
        %v235 = vld [vmem:[%s194 + $0x8] sm:$0xff]
        %v236 = vmax.f32 %v232, 0.0
        %v237 = vmax.f32 %v233, 0.0
        %v238 = vmul.f32 %v232, %v234
        %v239 = vmul.f32 %v233, %v235
        %v240 = vsub.f32 %v236, %v238
        %v241 = vsub.f32 %v237, %v239
        %v242 = vand.u32 2147483647, %v232
        %v243 = vand.u32 2147483647, %v233
        %v244 = vsub.f32 0.0, %v242
        %v245 = vsub.f32 0.0, %v243
        %v246 = vmul.f32 %v244, 1.442695
        %v247 = vpow.pop %v246
        %v248 = vmul.f32 %v245, 1.442695
        %v249 = vpow.pop %v248
        %v250 = vadd.f32 %v247, 1.0
        %v251 = vlog2.pop %v250
        %v252 = vmul.f32 %v251, 0.6931472
        %v253 = vmul.f32 -0.5, %v247
        %v254 = vadd.f32 %v253, 1.0
        %v255 = vmul.f32 %v254, %v247
        %v256 = vand.u32 2147483647, %v247
        %vm257 = vcmp.lt.f32.partialorder %v256, 0.0004427343
        %v258 = vsel %vm257, %v255, %v252
        %v259 = vadd.f32 %v249, 1.0
        %v260 = vlog2.pop %v259
        %v261 = vmul.f32 %v260, 0.6931472
        %v262 = vmul.f32 -0.5, %v249
        %v263 = vadd.f32 %v262, 1.0
        %v264 = vmul.f32 %v263, %v249
        %v265 = vand.u32 2147483647, %v249
        %vm266 = vcmp.lt.f32.partialorder %v265, 0.0004427343
        %v267 = vsel %vm266, %v264, %v261
        %v268 = vadd.f32 %v240, %v258
        %v269 = vadd.f32 %v241, %v267
        %v270 = vsub.f32 0.0, %v232
        %v271 = vsub.f32 0.0, %v233
        %v272 = vmul.f32 %v234, 2.0
        %v273 = vmul.f32 %v235, 2.0
        %v274 = vsub.f32 %v272, 1.0
        %v275 = vsub.f32 %v273, 1.0
        %v276 = vmul.f32 %v270, %v274
        %v277 = vmul.f32 %v271, %v275
        %v278 = vmin.f32 %v276, 0.0
        %v279 = vmin.f32 %v277, 0.0
        %v280 = vand.u32 2147483647, %v276
        %v281 = vand.u32 2147483647, %v277
        %v282 = vsub.f32 0.0, %v280
        %v283 = vsub.f32 0.0, %v281
        %v284 = vmul.f32 %v282, 1.442695
        %v285 = vpow.pop %v284
        %v286 = vmul.f32 %v283, 1.442695
        %v287 = vpow.pop %v286
        %v288 = vadd.f32 %v285, 1.0
        %v289 = vlog2.pop %v288
        %v290 = vmul.f32 %v289, 0.6931472
        %v291 = vmul.f32 -0.5, %v285
        %v292 = vadd.f32 %v291, 1.0
        %v293 = vmul.f32 %v292, %v285
        %v294 = vand.u32 2147483647, %v285
        %vm295 = vcmp.lt.f32.partialorder %v294, 0.0004427343
        %v296 = vsel %vm295, %v293, %v290
        %v297 = vadd.f32 %v287, 1.0
        %v298 = vlog2.pop %v297
        %v299 = vmul.f32 %v298, 0.6931472
        %v300 = vmul.f32 -0.5, %v287
        %v301 = vadd.f32 %v300, 1.0
        %v302 = vmul.f32 %v301, %v287
        %v303 = vand.u32 2147483647, %v287
        %vm304 = vcmp.lt.f32.partialorder %v303, 0.0004427343
        %v305 = vsel %vm304, %v302, %v299
        %v306 = vsub.f32 %v278, %v296
        %v307 = vsub.f32 %v279, %v305
        %v308 = vmul.f32 %v306, 2.0
        %v309 = vmul.f32 %v307, 2.0
        %v310 = vmul.f32 %v308, 1.442695
        %v311 = vpow.pop %v310
        %v312 = vmul.f32 %v309, 1.442695
        %v313 = vpow.pop %v312
        %v314 = vmul.f32 %v311, %v268
        %v315 = vmul.f32 %v313, %v269
        %s316 = sadd.s32 %s26, %s27
        %s317 = smul.u32 %s316, 16
        %v318 = vlaneseq
        %v319 = vshrl.u32 %v318, 7
        %v320 = vadd.s32 %v319, 8
        %v321 = vlaneseq
        %v322 = vand.u32 %v321, 127
        %v323 = vstv %s317
        %v324 = vadd.s32 %v323, %v319
        %v325 = vadd.s32 %v323, %v320
        %v326 = vmul.u32 %v324, 128
        %v327 = vmul.u32 %v325, 128
        %v328 = vadd.s32 %v326, %v322
        %v329 = vadd.s32 %v327, %v322
        %vm330 = vcmp.lt.s32.totalorder %v328, 2048
        %vm331 = vcmp.lt.s32.totalorder %v329, 2048
        %v332 = vsel %vm330, %v314, 0.0
        %v333 = vsel %vm331, %v315, 0.0
        %v334 = vld [vmem:[%s219] sm:$0xff]
        %v335 = vadd.f32 %v332, %v333
        %v336 = vadd.f32 %v334, %v335
        %337 = vst [vmem:[%s219] sm:$0xff] %v336
        %s338 = scalar_lea.vmem %s219, 8 [#allocation7]
        %v339 = vld [vmem:[%s338] sm:$0xff]
        %v340 = vadd.f32 %v238, %v239
        %v341 = vadd.f32 %v339, %v340
        %342 = vst [vmem:[%s338] sm:$0xff] %v341
        %s343 = scalar_lea.vmem %s219, 16 [#allocation7]
        %v344 = vld [vmem:[%s343] sm:$0xff]
        %v345 = vadd.f32 %v232, %v233
        %v346 = vadd.f32 %v344, %v345
        %347 = vst [vmem:[%s343] sm:$0xff] %v346
        %s348 = scalar_lea.vmem %s219, 24 [#allocation7]
        %v349 = vld [vmem:[%s348] sm:$0xff]
        %v350 = vadd.f32 %v234, %v235
        %v351 = vadd.f32 %v349, %v350
        %352 = vst [vmem:[%s348] sm:$0xff] %v351
        %s353 = sand.u32 %s98, 1
        %s354 = scalar_lea.sflag [#allocation4], %s353
        %s355 = sand.u32 %s98, 1
        %s356 = smul.addr %s355, 32
        %s357 = scalar_lea.vmem [#allocation7], %s356
        // Predicated region
        $region41: #{tpu_custom_call.1} parent=27 // pred_check
          %p358 = pneg %p108
        $region42: #{tpu_custom_call.1} parent=27 // pred_check_branch
          %360 = sbr.rel (%p358) target = $region44
        $region43: #{tpu_custom_call.1} parent=27 // pred_region
          %s362 = ssub.s32 512, 512
          %363 = vsyncadd %s354, %s362
          %s364 = smul.addr %s26, 4
          %s365 = smul.addr %s364, 128
          %s366 = scalar_lea.hbm %s2, %s365
          %s367 = sshll.u32 %s357, 4
          %s368 = int_to_ptr.vmem [resolvable:$true] %s367
          %373 = dma.vmem_to_hbm [thread:$0]  %s368, 512, %s366, %s354, 128, 128, 8
        $region44: #{tpu_custom_call.1} parent=27 // pred_fallthru
          _
      $region28: #{tpu_custom_call.1} parent=5 // pred_fallthru
        _
      %p374 = scmp.le.s32.totalorder 2, %s17
      // Predicated region
      $region45: #{tpu_custom_call.1} parent=5 // pred_check
        %p375 = pneg %p374
      $region46: #{tpu_custom_call.1} parent=5 // pred_check_branch
        %377 = sbr.rel (%p375) target = $region48
      $region47: #{tpu_custom_call.1} parent=5 // pred_region
        %s378 = ssub.s32 %s17, 2
        // Predicated region
        $region49: #{tpu_custom_call.1} parent=47 // pred_check
          %p379 = pneg %p114
        $region50: #{tpu_custom_call.1} parent=47 // pred_check_branch
          %381 = sbr.rel (%p379) target = $region52
        $region51: #{tpu_custom_call.1} parent=47 // pred_region
          %s382 = sand.u32 %s99, 1
          %s383 = scalar_lea.sflag [#allocation4], %s382
          %s384 = sand.u32 %s99, 1
          %s385 = smul.addr %s384, 32
          %s386 = scalar_lea.vmem [#allocation7], %s385
          %387 = dma.done %s383, 512
        $region52: #{tpu_custom_call.1} parent=47 // pred_fallthru
          _
      $region48: #{tpu_custom_call.1} parent=5 // pred_fallthru
        _
    $region6: #{tpu_custom_call.1} parent=1 // loop_footer
      %s21 = sadd.s32 1, %s17
    $region7: #{tpu_custom_call.1} parent=1 // loop_footer_branch
      %16 = sbr.rel target = $region3
    $region8: #{tpu_custom_call.1} parent=1 // loop_exit
      _
    %388 = vsyncpa [#allocation3], 1
    %s389 = scalar_lea.sflag [#allocation3], 1
    %390 = vsyncpa %s389, 1
    %391 = vsyncpa [#allocation6], 1
    %s392 = scalar_lea.sflag [#allocation6], 1
    %393 = vsyncpa %s392, 1
    %394 = vsyncpa [#allocation4], 1
    %s395 = scalar_lea.sflag [#allocation4], 1
    %396 = vsyncpa %s395, 1

</llo_original>
